<compile_context>
chip_gen: v7x
topology: tpu7x:2x2x1
jax: 0.10.0
libtpu: 0.0.40
codegen_flags: <defaults>
</compile_context>

<pallas_src>
import functools

import jax
import jax.numpy as jnp
from jax import lax
from jax.experimental import pallas as pl
from jax.experimental.pallas import tpu as pltpu

KSIZE = 3  # kernel_size=3, stride=1, padding=1 (fixed by the module)


def _depthwise_kernel(x_ref, w_ref, b_ref, o_ref, xp_ref, *, W, act, activation):
    # x_ref : (BT, H*W)              input planes, row-major flattened (lane-dense)
    # w_ref : (9,)  f32              3x3 weights, row-major (SMEM, scalar reads)
    # b_ref : (1,)  f32              bias (SMEM, scalar read)
    # o_ref : (BT, H*W)              output planes
    # xp_ref: (BT, H*W + 2*(W+1))    f32 scratch; plane lives at offset W+1, the
    #                                (W+1)-wide strips at both ends stay zero and act as
    #                                the conv's top/bottom zero padding.
    BT, HW = o_ref.shape
    P = W + 1  # flat halo width at each end

    # Zero only the pad strips. Unconditional: scratch is per-core and persists across
    # grid steps, and its initial contents are undefined.
    xp_ref[:, :P] = jnp.zeros((BT, P), jnp.float32)
    xp_ref[:, P + HW:] = jnp.zeros((BT, P), jnp.float32)

    x = x_ref[...].astype(jnp.float32)
    xp_ref[:, P:P + HW] = x

    w = [w_ref[i] for i in range(KSIZE * KSIZE)]  # row-major: w[3*(di+1)+(dj+1)]
    bias = b_ref[0]

    def tap(di, dj):
        off = P + di * W + dj
        return xp_ref[:, off:off + HW]

    # Left/right column masks (the flat halo only provides vertical zero padding; a
    # horizontal neighbour of an edge column wraps to the adjacent row and must be
    # masked). One mask multiply per side covers all three taps of that side.
    col = lax.broadcasted_iota(jnp.int32, (1, HW), 1) % W
    mask_l = (col != 0).astype(jnp.float32)        # j-1 invalid at j == 0
    mask_r = (col != W - 1).astype(jnp.float32)    # j+1 invalid at j == W-1

    # Center column (no mask) with bias + center tap folded into the init.
    acc = x * w[4] + bias
    acc = acc + w[1] * tap(-1, 0) + w[7] * tap(1, 0)
    acc = acc + mask_l * (w[0] * tap(-1, -1) + w[3] * tap(0, -1) + w[6] * tap(1, -1))
    acc = acc + mask_r * (w[2] * tap(-1, 1) + w[5] * tap(0, 1) + w[8] * tap(1, 1))

    if act:
        if activation == "relu":
            acc = jnp.maximum(acc, 0.0)
        elif activation == "lrelu":
            acc = jnp.where(acc > 0.0, acc, 0.01 * acc)
        elif activation == "tanh":
            acc = jnp.tanh(acc)
    o_ref[...] = acc.astype(o_ref.dtype)


def _choose_block_planes(B, H, W):
    """Planes per grid step (second-to-last block dim: multiple of 8, or the full B)."""
    HW = H * W
    # f32 bytes per plane in flight: double-buffered input + output + halo scratch.
    per_plane = 4 * (2 * HW + 2 * HW + (HW + 2 * (W + 1)))
    budget = 24 * 1024 * 1024
    bt = max(1, budget // per_plane)
    if bt >= B:
        # Whole array fits in one block; split once if there is enough work to feed
        # both TensorCores via the "parallel" grid axis.
        if B >= 16 and B * per_plane > (4 * 1024 * 1024):
            half = -(-((B + 1) // 2) // 8) * 8
            return min(half, B)
        return B
    return min(B, max(8, (bt // 8) * 8))


def depthwise_block_forward(x, weight, bias, act=True, activation="relu"):
    """x: (N, C, H, W); weight: 3x3 kernel; bias: scalar. Matches depthwise_block.forward."""
    N, C, H, W = x.shape
    B = N * C
    HW = H * W

    x2 = x.reshape(B, HW)  # free: contiguous row-major reshape, no data movement
    w9 = jnp.asarray(weight, jnp.float32).reshape(KSIZE * KSIZE)
    b1 = jnp.asarray(bias, jnp.float32).reshape(1)

    BT = _choose_block_planes(B, H, W)
    grid = (pl.cdiv(B, BT),)

    # Actual f32 VMEM footprint for the chosen block (in/out double-buffered + scratch).
    vmem_need = 4 * BT * (4 * HW + (HW + 2 * (W + 1)))
    vmem_limit = min(64 * 1024 * 1024, max(32 * 1024 * 1024, vmem_need + (4 << 20)))

    kernel = functools.partial(_depthwise_kernel, W=W, act=act, activation=activation)

    out = pl.pallas_call(
        kernel,
        out_shape=jax.ShapeDtypeStruct((B, HW), x.dtype),
        grid_spec=pltpu.PrefetchScalarGridSpec(
            num_scalar_prefetch=0,
            grid=grid,
            in_specs=[
                pl.BlockSpec((BT, HW), lambda i: (i, 0)),
                pl.BlockSpec(memory_space=pltpu.MemorySpace.SMEM),  # 3x3 weight (flat)
                pl.BlockSpec(memory_space=pltpu.MemorySpace.SMEM),  # bias
            ],
            out_specs=pl.BlockSpec((BT, HW), lambda i: (i, 0)),
            scratch_shapes=[pltpu.VMEM((BT, HW + 2 * (W + 1)), jnp.float32)],
        ),
        compiler_params=pltpu.CompilerParams(
            dimension_semantics=("parallel",),
            vmem_limit_bytes=vmem_limit,
        ),
    )(x2, w9, b1)

    return out.reshape(N, C, H, W)


def _reference(x, weight, bias, act=True):
    """Pure-JAX reference matching the PyTorch module (ReLU activation)."""
    N, C, H, W = x.shape
    planes = x.reshape(N * C, 1, H, W)
    w = jnp.asarray(weight, jnp.float32).reshape(1, 1, KSIZE, KSIZE)
    y = jax.lax.conv_general_dilated(
        planes, w, window_strides=(1, 1), padding=((1, 1), (1, 1)),
        dimension_numbers=("NCHW", "OIHW", "NCHW"))
    y = y + jnp.asarray(bias, jnp.float32).reshape(1, 1, 1, 1)
    y = y.reshape(N, C, H, W)
    if act:
        y = jnp.maximum(y, 0.0)
    return y


if __name__ == "__main__":
    key = jax.random.PRNGKey(0)
    kx, kw, kb = jax.random.split(key, 3)

    # Small shapes consistent with the module: batch=2, channels=4, spatial=16.
    N, C, H, W = 2, 4, 16, 16
    x = jax.random.normal(kx, (N, C, H, W), dtype=jnp.float32)

    # Deterministic parameter init mimicking nn.Conv2d(1,1,3) default:
    # U(-1/sqrt(fan_in), 1/sqrt(fan_in)), fan_in = 1*3*3 = 9 -> bound = 1/3.
    bound = 1.0 / 3.0
    weight = jax.random.uniform(kw, (KSIZE, KSIZE), jnp.float32, -bound, bound)
    bias = jax.random.uniform(kb, (), jnp.float32, -bound, bound)

    y = depthwise_block_forward(x, weight, bias, act=True)
    y = jax.block_until_ready(y)

    y_ref = _reference(x, weight, bias, act=True)
    assert y.shape == (N, C, H, W)
    assert jnp.allclose(y, y_ref, atol=1e-5, rtol=1e-5), "mismatch vs reference"

    print("KERNEL_OK")
</pallas_src>

<mosaic_0001>
module attributes {stable_mosaic.version = 11 : i64} {
  func.func @_depthwise_kernel(%arg0: i32, %arg1: memref<8x256xf32, #tpu.memory_space<vmem>>, %arg2: memref<9xf32, #tpu.memory_space<smem>>, %arg3: memref<1xf32, #tpu.memory_space<smem>>, %arg4: memref<8x256xf32, #tpu.memory_space<vmem>>, %arg5: memref<8x290xf32, #tpu.memory_space<vmem>>) attributes {dimension_semantics = [#tpu.dimension_semantics<parallel>], iteration_bounds = array<i64: 1>, scalar_prefetch = 0 : i64, scratch_operands = 1 : i64, tpu.core_type = #tpu.core_type<tc>, window_params = [{transform_indices = @transform_0, window_bounds = array<i64: 8, 256>}, {transform_indices = @transform_1, window_bounds = array<i64: 9>}, {transform_indices = @transform_2, window_bounds = array<i64: 1>}, {transform_indices = @transform_3, window_bounds = array<i64: 8, 256>}]} {
    %cst = arith.constant 0.000000e+00 : f32
    %0 = vector.broadcast %cst : f32 to vector<8x17xf32>
    %c0 = arith.constant 0 : index
    %c0_0 = arith.constant 0 : index
    %1 = vector.load %arg5[%c0, %c0_0] : memref<8x290xf32, #tpu.memory_space<vmem>>, vector<8x17xf32>
    tpu.vector_store %arg5[%c0, %c0_0], %0 {strides = array<i32>} : memref<8x290xf32, #tpu.memory_space<vmem>>, vector<8x17xf32>,
    %cst_1 = arith.constant 0.000000e+00 : f32
    %2 = vector.broadcast %cst_1 : f32 to vector<8x17xf32>
    %c0_2 = arith.constant 0 : index
    %c273 = arith.constant 273 : index
    %3 = vector.load %arg5[%c0_2, %c273] : memref<8x290xf32, #tpu.memory_space<vmem>>, vector<8x17xf32>
    tpu.vector_store %arg5[%c0_2, %c273], %2 {strides = array<i32>} : memref<8x290xf32, #tpu.memory_space<vmem>>, vector<8x17xf32>,
    %c0_3 = arith.constant 0 : index
    %c0_4 = arith.constant 0 : index
    %4 = vector.load %arg1[%c0_3, %c0_4] : memref<8x256xf32, #tpu.memory_space<vmem>>, vector<8x256xf32>
    %c0_5 = arith.constant 0 : index
    %c17 = arith.constant 17 : index
    %5 = vector.load %arg5[%c0_5, %c17] : memref<8x290xf32, #tpu.memory_space<vmem>>, vector<8x256xf32>
    tpu.vector_store %arg5[%c0_5, %c17], %4 {strides = array<i32>} : memref<8x290xf32, #tpu.memory_space<vmem>>, vector<8x256xf32>,
    %c0_6 = arith.constant 0 : index
    %6 = memref.load %arg2[%c0_6] : memref<9xf32, #tpu.memory_space<smem>>
    %c1 = arith.constant 1 : index
    %7 = memref.load %arg2[%c1] : memref<9xf32, #tpu.memory_space<smem>>
    %c2 = arith.constant 2 : index
    %8 = memref.load %arg2[%c2] : memref<9xf32, #tpu.memory_space<smem>>
    %c3 = arith.constant 3 : index
    %9 = memref.load %arg2[%c3] : memref<9xf32, #tpu.memory_space<smem>>
    %c4 = arith.constant 4 : index
    %10 = memref.load %arg2[%c4] : memref<9xf32, #tpu.memory_space<smem>>
    %c5 = arith.constant 5 : index
    %11 = memref.load %arg2[%c5] : memref<9xf32, #tpu.memory_space<smem>>
    %c6 = arith.constant 6 : index
    %12 = memref.load %arg2[%c6] : memref<9xf32, #tpu.memory_space<smem>>
    %c7 = arith.constant 7 : index
    %13 = memref.load %arg2[%c7] : memref<9xf32, #tpu.memory_space<smem>>
    %c8 = arith.constant 8 : index
    %14 = memref.load %arg2[%c8] : memref<9xf32, #tpu.memory_space<smem>>
    %c0_7 = arith.constant 0 : index
    %15 = memref.load %arg3[%c0_7] : memref<1xf32, #tpu.memory_space<smem>>
    %16 = tpu.iota {dimensions = array<i32: 1>} : vector<1x256xi32>
    %c16_i32 = arith.constant 16 : i32
    %c0_i32 = arith.constant 0 : i32
    %17 = arith.cmpi eq, %c16_i32, %c0_i32 : i32
    %c1_i32 = arith.constant 1 : i32
    %18 = arith.select %17, %c1_i32, %c16_i32 : i32
    %19 = vector.broadcast %18 : i32 to vector<1x256xi32>
    %20 = arith.remsi %16, %19 : vector<1x256xi32>
    %c0_i32_8 = arith.constant 0 : i32
    %21 = vector.broadcast %c0_i32_8 : i32 to vector<1x256xi32>
    %22 = arith.cmpi ne, %20, %21 : vector<1x256xi32>
    %c0_i32_9 = arith.constant 0 : i32
    %23 = vector.broadcast %c0_i32_9 : i32 to vector<1x256xi32>
    %24 = arith.cmpi slt, %20, %23 : vector<1x256xi32>
    %c0_i32_10 = arith.constant 0 : i32
    %25 = arith.cmpi slt, %18, %c0_i32_10 : i32
    %26 = vector.broadcast %25 : i1 to vector<1x256xi1>
    %27 = vector.broadcast %26 : vector<1x256xi1> to vector<1x256xi1>
    %28 = arith.xori %24, %27 : vector<1x256xi1>
    %29 = arith.andi %28, %22 : vector<1x256xi1>
    %30 = vector.broadcast %18 : i32 to vector<1x256xi32>
    %31 = arith.addi %20, %30 : vector<1x256xi32>
    %32 = arith.select %29, %31, %20 : vector<1x256xi1>, vector<1x256xi32>
    %c0_i32_11 = arith.constant 0 : i32
    %33 = vector.broadcast %c0_i32_11 : i32 to vector<1x256xi32>
    %34 = arith.cmpi ne, %32, %33 : vector<1x256xi32>
    %35 = arith.extui %34 : vector<1x256xi1> to vector<1x256xi32>
    %36 = arith.sitofp %35 : vector<1x256xi32> to vector<1x256xf32>
    %c15_i32 = arith.constant 15 : i32
    %37 = vector.broadcast %c15_i32 : i32 to vector<1x256xi32>
    %38 = arith.cmpi ne, %32, %37 : vector<1x256xi32>
    %39 = arith.extui %38 : vector<1x256xi1> to vector<1x256xi32>
    %40 = arith.sitofp %39 : vector<1x256xi32> to vector<1x256xf32>
    %41 = vector.broadcast %10 : f32 to vector<8x256xf32>
    %42 = arith.mulf %4, %41 : vector<8x256xf32>
    %43 = vector.broadcast %15 : f32 to vector<8x256xf32>
    %44 = arith.addf %42, %43 : vector<8x256xf32>
    %c0_12 = arith.constant 0 : index
    %c1_13 = arith.constant 1 : index
    %45 = vector.load %arg5[%c0_12, %c1_13] : memref<8x290xf32, #tpu.memory_space<vmem>>, vector<8x256xf32>
    %46 = vector.broadcast %7 : f32 to vector<8x256xf32>
    %47 = arith.mulf %46, %45 : vector<8x256xf32>
    %48 = arith.addf %44, %47 : vector<8x256xf32>
    %c0_14 = arith.constant 0 : index
    %c33 = arith.constant 33 : index
    %49 = vector.load %arg5[%c0_14, %c33] : memref<8x290xf32, #tpu.memory_space<vmem>>, vector<8x256xf32>
    %50 = vector.broadcast %13 : f32 to vector<8x256xf32>
    %51 = arith.mulf %50, %49 : vector<8x256xf32>
    %52 = arith.addf %48, %51 : vector<8x256xf32>
    %c0_15 = arith.constant 0 : index
    %c0_16 = arith.constant 0 : index
    %53 = vector.load %arg5[%c0_15, %c0_16] : memref<8x290xf32, #tpu.memory_space<vmem>>, vector<8x256xf32>
    %54 = vector.broadcast %6 : f32 to vector<8x256xf32>
    %55 = arith.mulf %54, %53 : vector<8x256xf32>
    %c0_17 = arith.constant 0 : index
    %c16 = arith.constant 16 : index
    %56 = vector.load %arg5[%c0_17, %c16] : memref<8x290xf32, #tpu.memory_space<vmem>>, vector<8x256xf32>
    %57 = vector.broadcast %9 : f32 to vector<8x256xf32>
    %58 = arith.mulf %57, %56 : vector<8x256xf32>
    %59 = arith.addf %55, %58 : vector<8x256xf32>
    %c0_18 = arith.constant 0 : index
    %c32 = arith.constant 32 : index
    %60 = vector.load %arg5[%c0_18, %c32] : memref<8x290xf32, #tpu.memory_space<vmem>>, vector<8x256xf32>
    %61 = vector.broadcast %12 : f32 to vector<8x256xf32>
    %62 = arith.mulf %61, %60 : vector<8x256xf32>
    %63 = arith.addf %59, %62 : vector<8x256xf32>
    %64 = vector.broadcast %36 : vector<1x256xf32> to vector<8x256xf32>
    %65 = arith.mulf %64, %63 : vector<8x256xf32>
    %66 = arith.addf %52, %65 : vector<8x256xf32>
    %c0_19 = arith.constant 0 : index
    %c2_20 = arith.constant 2 : index
    %67 = vector.load %arg5[%c0_19, %c2_20] : memref<8x290xf32, #tpu.memory_space<vmem>>, vector<8x256xf32>
    %68 = vector.broadcast %8 : f32 to vector<8x256xf32>
    %69 = arith.mulf %68, %67 : vector<8x256xf32>
    %c0_21 = arith.constant 0 : index
    %c18 = arith.constant 18 : index
    %70 = vector.load %arg5[%c0_21, %c18] : memref<8x290xf32, #tpu.memory_space<vmem>>, vector<8x256xf32>
    %71 = vector.broadcast %11 : f32 to vector<8x256xf32>
    %72 = arith.mulf %71, %70 : vector<8x256xf32>
    %73 = arith.addf %69, %72 : vector<8x256xf32>
    %c0_22 = arith.constant 0 : index
    %c34 = arith.constant 34 : index
    %74 = vector.load %arg5[%c0_22, %c34] : memref<8x290xf32, #tpu.memory_space<vmem>>, vector<8x256xf32>
    %75 = vector.broadcast %14 : f32 to vector<8x256xf32>
    %76 = arith.mulf %75, %74 : vector<8x256xf32>
    %77 = arith.addf %73, %76 : vector<8x256xf32>
    %78 = vector.broadcast %40 : vector<1x256xf32> to vector<8x256xf32>
    %79 = arith.mulf %78, %77 : vector<8x256xf32>
    %80 = arith.addf %66, %79 : vector<8x256xf32>
    %cst_23 = arith.constant 0.000000e+00 : f32
    %81 = vector.broadcast %cst_23 : f32 to vector<8x256xf32>
    %82 = arith.maximumf %80, %81 : vector<8x256xf32>
    %c0_24 = arith.constant 0 : index
    %c0_25 = arith.constant 0 : index
    %83 = vector.load %arg4[%c0_24, %c0_25] : memref<8x256xf32, #tpu.memory_space<vmem>>, vector<8x256xf32>
    tpu.vector_store %arg4[%c0_24, %c0_25], %82 {strides = array<i32>} : memref<8x256xf32, #tpu.memory_space<vmem>>, vector<8x256xf32>,
    return
  }
  func.func @transform_0(%arg0: i32) -> (i32, i32) {
    %c0_i32 = arith.constant 0 : i32
    %c0_i32_0 = arith.constant 0 : i32
    return %arg0, %c0_i32 : i32, i32
  }
  func.func @transform_1(%arg0: i32) -> i32 {
    %c0_i32 = arith.constant 0 : i32
    %c0_i32_0 = arith.constant 0 : i32
    return %c0_i32 : i32
  }
  func.func @transform_2(%arg0: i32) -> i32 {
    %c0_i32 = arith.constant 0 : i32
    %c0_i32_0 = arith.constant 0 : i32
    return %c0_i32 : i32
  }
  func.func @transform_3(%arg0: i32) -> (i32, i32) {
    %c0_i32 = arith.constant 0 : i32
    %c0_i32_0 = arith.constant 0 : i32
    return %arg0, %c0_i32 : i32, i32
  }
}

</mosaic_0001>

<llo_original>
// kernel: tpu_custom_call.1
$region0: #{tpu_custom_call.1}
  #allocation0 [shape = 'u32[]', space=smem, size = 0x4, offset = 0x4, fixed_abs, tag = 'smem constant byte address 0x4 - core index']
  #allocation1 [shape = 'u32[144,128]{1,0:T(1,128)}', space=vmem, size = 0x12000, scoped, tag = 'internal scratch']
  #allocation2 [shape = 'f32[8,290]{1,0:T(8,128)}', space=vmem, size = 0x3000, scoped, tag = 'scratch operand']
  #allocation3 [shape = 'f32[1]{0:T(128)S(6)}', space=smem, size = 0x200, scoped, tag = 'scoped memory for tpu_custom_call.1']
  %s0 = inlined_call_operand.hbm [shape: f32[8,256], index: 0, kind: input, shape index: {}]
  %s1 = inlined_call_operand.vmem [shape: f32[9], index: 1, kind: input, shape index: {}]
  %s2 = inlined_call_operand.<no memory space> [shape: f32[1], index: 2, kind: input, shape index: {}]
  %s3 = inlined_call_operand.hbm [shape: f32[8,256], index: 3, kind: output, shape index: {}]
  %s4 = sld [smem:[#allocation0]]
  $region30: #{tpu_custom_call.1} parent=0
    _
  %s6 = ssub.s32 1, %s4
  %s7 = scalar_select 0, %s6, %s4
  %8 = sst [smem:[#allocation3]] %s2
  $region1: #{tpu_custom_call.1} parent=0
    #allocation4 [shape = 'u8[8192]{0}', space=vmem, size = 0x2000, scoped, tag = 'input window, operand 0, single buffered']
    #allocation5 [shape = 's32[1]{0}', space=sflag, size = 0x4, scoped, tag = 'scoped memory for tpu_custom_call.1']
    #allocation6 [shape = 's32[1]{0}', space=sflag, size = 0x4, scoped, tag = 'scoped memory for tpu_custom_call.1']
    #allocation7 [shape = 's32[1]{0}', space=sflag, size = 0x4, scoped, tag = 'scoped memory for tpu_custom_call.1']
    #allocation8 [shape = 'u8[512]{0}', space=smem, size = 0x200, scoped, tag = 'input window, operand 1, single buffered']
    #allocation9 [shape = 'u8[8192]{0}', space=vmem, size = 0x2000, scoped, tag = 'output window, operand 0, single buffered']
    %9 = vsyncpa [#allocation5], 0
    %10 = vsyncpa [#allocation7], 0
    %11 = vsyncpa [#allocation6], 0
    // Predicated region
    $region2: #{tpu_custom_call.1} parent=1 // pred_check
      _
    $region3: #{tpu_custom_call.1} parent=1 // pred_check_branch
      %13 = sbr.rel (0) target = $region5
    $region4: #{tpu_custom_call.1} parent=1 // pred_region
      %s15 = ssub.s32 256, 256
      %16 = vsyncadd [#allocation5], %s15
      %s18 = sshll.u32 [#allocation4], 4
      %s19 = int_to_ptr.vmem [resolvable:$true] %s18
      %21 = dma.hbm_to_vmem [thread:$0]  %s0, 256, %s19, [#allocation5]
    $region5: #{tpu_custom_call.1} parent=1 // pred_fallthru
      _
    // Predicated region
    $region6: #{tpu_custom_call.1} parent=1 // pred_check
      _
    $region7: #{tpu_custom_call.1} parent=1 // pred_check_branch
      %23 = sbr.rel (0) target = $region9
    $region8: #{tpu_custom_call.1} parent=1 // pred_region
      %s25 = ssub.s32 16, 16
      %26 = vsyncadd [#allocation7], %s25
      %s28 = sshll.u32 %s1, 4
      %s29 = int_to_ptr.vmem [resolvable:$true] %s28
      %31 = dma.vmem_to_smem %s29, 16, [#allocation8], [#allocation7]
    $region9: #{tpu_custom_call.1} parent=1 // pred_fallthru
      _
    // Predicated region
    $region10: #{tpu_custom_call.1} parent=1 // pred_check
      _
    $region11: #{tpu_custom_call.1} parent=1 // pred_check_branch
      %33 = sbr.rel (0) target = $region13
    $region12: #{tpu_custom_call.1} parent=1 // pred_region
      _
    $region13: #{tpu_custom_call.1} parent=1 // pred_fallthru
      _
    // Predicated region
    $region14: #{tpu_custom_call.1} parent=1 // pred_check
      _
    $region15: #{tpu_custom_call.1} parent=1 // pred_check_branch
      %35 = sbr.rel (0) target = $region17
    $region16: #{tpu_custom_call.1} parent=1 // pred_region
      %36 = dma.done [#allocation5], 256
    $region17: #{tpu_custom_call.1} parent=1 // pred_fallthru
      _
    // Predicated region
    $region18: #{tpu_custom_call.1} parent=1 // pred_check
      _
    $region19: #{tpu_custom_call.1} parent=1 // pred_check_branch
      %38 = sbr.rel (0) target = $region21
    $region20: #{tpu_custom_call.1} parent=1 // pred_region
      %39 = dma.done [#allocation7], 16
    $region21: #{tpu_custom_call.1} parent=1 // pred_fallthru
      _
    %40 = sfence
    %vm41 = vcmask 138240
    %42 = vst.msk [vmem:[#allocation2] sm:$0xff] %vm41, 0.0
    %vm43 = vcmask 277640
    %44 = vst.msk [vmem:[#allocation2 + $0x10] sm:$0xff] %vm43, 0.0
    %v45 = vld [vmem:[#allocation4] sm:$0xff]
    %v46 = vld [vmem:[#allocation4 + $0x8] sm:$0xff]
    %49 = vrot.lane.b32.xlu0 %v45, 17
    %v50 = vpop.permute.xlu0 %49
    %51 = vrot.lane.b32.xlu0 %v46, 17
    %v52 = vpop.permute.xlu0 %51
    %v53 = vsel %vm41, %v50, %v52
    %vm57 = vcmask 1047688
    %58 = vst.msk [vmem:[#allocation2] sm:$0xff] %vm57, %v50
    %59 = vst [vmem:[#allocation2 + $0x8] sm:$0xff] %v53
    %60 = vst.msk [vmem:[#allocation2 + $0x10] sm:$0xff] %vm41, %v52
    %s61 = sld [smem:[#allocation8]]
    %s62 = sld [smem:[#allocation8 + $0x1]]
    %s63 = sld [smem:[#allocation8 + $0x2]]
    %s64 = sld [smem:[#allocation8 + $0x3]]
    %s65 = sld [smem:[#allocation8 + $0x4]]
    %s66 = sld [smem:[#allocation8 + $0x5]]
    %s67 = sld [smem:[#allocation8 + $0x6]]
    %s68 = sld [smem:[#allocation8 + $0x7]]
    %s69 = sld [smem:[#allocation8 + $0x8]]
    %s70 = sld [smem:[#allocation3]]
    %v71 = vlaneseq
    %v72 = vand.u32 %v71, 127
    %v73 = vadd.s32 %v72, 128
    %vm74 = vcmp.lt.s32.totalorder %v72, 0
    %v75 = vsub.s32 0, %v72
    %v76 = vsel %vm74, %v75, %v72
    %v77 = vshrl.u32 %v76, 4
    %v78 = vand.u32 %v76, 15
    %v79 = vsub.s32 0, %v78
    %v80 = vsel %vm74, %v79, %v78
    %vm81 = vcmp.lt.s32.totalorder %v73, 0
    %v82 = vsub.s32 0, %v73
    %v83 = vsel %vm81, %v82, %v73
    %v84 = vshrl.u32 %v83, 4
    %v85 = vand.u32 %v83, 15
    %v86 = vsub.s32 0, %v85
    %v87 = vsel %vm81, %v86, %v85
    %vm88 = vcmp.ne.s32.totalorder %v80, 0
    %vm89 = vcmp.ne.s32.totalorder %v87, 0
    %vm90 = vcmp.lt.s32.totalorder %v80, 0
    %vm91 = vcmp.lt.s32.totalorder %v87, 0
    %vm92 = vmand %vm90, %vm88
    %vm93 = vmand %vm91, %vm89
    %v94 = vadd.s32 %v80, 16
    %v95 = vadd.s32 %v87, 16
    %v96 = vsel %vm92, %v94, %v80
    %v97 = vsel %vm93, %v95, %v87
    %vm98 = vcmp.ne.s32.totalorder %v96, 0
    %vm99 = vcmp.ne.s32.totalorder %v97, 0
    %v100 = vsel %vm98, 1, 0
    %v101 = vsel %vm99, 1, 0
    %v102 = vcvt.s32.f32 %v100
    %v103 = vcvt.s32.f32 %v101
    %vm104 = vcmp.ne.s32.totalorder %v96, 15
    %vm105 = vcmp.ne.s32.totalorder %v97, 15
    %v106 = vsel %vm104, 1, 0
    %v107 = vsel %vm105, 1, 0
    %v108 = vcvt.s32.f32 %v106
    %v109 = vcvt.s32.f32 %v107
    %v110 = vstv %s65
    %v111 = vmul.f32 %v45, %v110
    %v112 = vmul.f32 %v46, %v110
    %v113 = vstv %s70
    %v114 = vadd.f32 %v111, %v113
    %v115 = vadd.f32 %v112, %v113
    %v116 = vld [vmem:[#allocation2] sm:$0xff]
    %v117 = vld [vmem:[#allocation2 + $0x8] sm:$0xff]
    %v118 = vld [vmem:[#allocation2 + $0x10] sm:$0xff]
    %v119 = vstv %s62
    %v120 = vmul.f32 %v119, %v116
    %v121 = vmul.f32 %v119, %v117
    %v122 = vmul.f32 %v119, %v118
    %126 = vrot.lane.b32.xlu0 %v120, 127
    %v127 = vpop.permute.xlu0 %126
    %128 = vrot.lane.b32.xlu0 %v121, 127
    %v129 = vpop.permute.xlu0 %128
    %130 = vrot.lane.b32.xlu0 %v122, 127
    %v131 = vpop.permute.xlu0 %130
    %vm132 = vcmask 1039360
    %v133 = vsel %vm132, %v127, %v129
    %v134 = vsel %vm132, %v129, %v131
    %v137 = vadd.f32 %v114, %v133
    %v138 = vadd.f32 %v115, %v134
    %v139 = vstv %s68
    %v140 = vmul.f32 %v139, %v116
    %v141 = vmul.f32 %v139, %v117
    %v142 = vmul.f32 %v139, %v118
    %146 = vrot.lane.b32.xlu0 %v140, 95
    %v147 = vpop.permute.xlu0 %146
    %148 = vrot.lane.b32.xlu0 %v141, 95
    %v149 = vpop.permute.xlu0 %148
    %150 = vrot.lane.b32.xlu0 %v142, 95
    %v151 = vpop.permute.xlu0 %150
    %vm152 = vcmask 777216
    %v153 = vsel %vm152, %v147, %v149
    %v154 = vsel %vm152, %v149, %v151
    %v157 = vadd.f32 %v137, %v153
    %v158 = vadd.f32 %v138, %v154
    %v159 = vstv %s61
    %v160 = vmul.f32 %v159, %v116
    %v161 = vmul.f32 %v159, %v117
    %v162 = vstv %s64
    %v163 = vmul.f32 %v162, %v116
    %v164 = vmul.f32 %v162, %v117
    %v165 = vmul.f32 %v162, %v118
    %169 = vrot.lane.b32.xlu0 %v163, 112
    %v170 = vpop.permute.xlu0 %169
    %171 = vrot.lane.b32.xlu0 %v164, 112
    %v172 = vpop.permute.xlu0 %171
    %173 = vrot.lane.b32.xlu0 %v165, 112
    %v174 = vpop.permute.xlu0 %173
    %vm175 = vcmask 916480
    %v176 = vsel %vm175, %v170, %v172
    %v177 = vsel %vm175, %v172, %v174
    %v180 = vadd.f32 %v160, %v176
    %v181 = vadd.f32 %v161, %v177
    %v182 = vstv %s67
    %v183 = vmul.f32 %v182, %v116
    %v184 = vmul.f32 %v182, %v117
    %v185 = vmul.f32 %v182, %v118
    %189 = vrot.lane.b32.xlu0 %v183, 96
    %v190 = vpop.permute.xlu0 %189
    %191 = vrot.lane.b32.xlu0 %v184, 96
    %v192 = vpop.permute.xlu0 %191
    %193 = vrot.lane.b32.xlu0 %v185, 96
    %v194 = vpop.permute.xlu0 %193
    %vm195 = vcmask 785408
    %v196 = vsel %vm195, %v190, %v192
    %v197 = vsel %vm195, %v192, %v194
    %v200 = vadd.f32 %v180, %v196
    %v201 = vadd.f32 %v181, %v197
    %v202 = vmul.f32 %v102, %v200
    %v203 = vmul.f32 %v103, %v201
    %v204 = vadd.f32 %v157, %v202
    %v205 = vadd.f32 %v158, %v203
    %v206 = vstv %s63
    %v207 = vmul.f32 %v206, %v116
    %v208 = vmul.f32 %v206, %v117
    %v209 = vmul.f32 %v206, %v118
    %v210 = vstv %s66
    %v211 = vmul.f32 %v210, %v116
    %v212 = vmul.f32 %v210, %v117
    %v213 = vmul.f32 %v210, %v118
    %217 = vrot.lane.b32.xlu0 %v211, 112
    %v218 = vpop.permute.xlu0 %217
    %219 = vrot.lane.b32.xlu0 %v212, 112
    %v220 = vpop.permute.xlu0 %219
    %221 = vrot.lane.b32.xlu0 %v213, 112
    %v222 = vpop.permute.xlu0 %221
    %v223 = vsel %vm175, %v218, %v220
    %v224 = vsel %vm175, %v220, %v222
    %v228 = vadd.f32 %v207, %v223
    %v229 = vadd.f32 %v208, %v224
    %v230 = vadd.f32 %v209, %v222
    %v231 = vstv %s69
    %v232 = vmul.f32 %v231, %v116
    %v233 = vmul.f32 %v231, %v117
    %v234 = vmul.f32 %v231, %v118
    %238 = vrot.lane.b32.xlu0 %v232, 96
    %v239 = vpop.permute.xlu0 %238
    %240 = vrot.lane.b32.xlu0 %v233, 96
    %v241 = vpop.permute.xlu0 %240
    %242 = vrot.lane.b32.xlu0 %v234, 96
    %v243 = vpop.permute.xlu0 %242
    %v244 = vsel %vm195, %v239, %v241
    %v245 = vsel %vm195, %v241, %v243
    %v249 = vadd.f32 %v228, %v244
    %v250 = vadd.f32 %v229, %v245
    %v251 = vadd.f32 %v230, %v243
    %255 = vrot.lane.b32.xlu0 %v249, 126
    %v256 = vpop.permute.xlu0 %255
    %257 = vrot.lane.b32.xlu0 %v250, 126
    %v258 = vpop.permute.xlu0 %257
    %259 = vrot.lane.b32.xlu0 %v251, 126
    %v260 = vpop.permute.xlu0 %259
    %vm261 = vcmask 1031168
    %v262 = vsel %vm261, %v256, %v258
    %v263 = vsel %vm261, %v258, %v260
    %v266 = vmul.f32 %v108, %v262
    %v267 = vmul.f32 %v109, %v263
    %v268 = vadd.f32 %v204, %v266
    %v269 = vadd.f32 %v205, %v267
    %v270 = vmax.f32 %v268, 0.0
    %v271 = vmax.f32 %v269, 0.0
    %272 = vst [vmem:[#allocation9] sm:$0xff] %v270
    %273 = vst [vmem:[#allocation9 + $0x8] sm:$0xff] %v271
    // Predicated region
    $region22: #{tpu_custom_call.1} parent=1 // pred_check
      _
    $region23: #{tpu_custom_call.1} parent=1 // pred_check_branch
      %275 = sbr.rel (0) target = $region25
    $region24: #{tpu_custom_call.1} parent=1 // pred_region
      %s277 = ssub.s32 256, 256
      %278 = vsyncadd [#allocation6], %s277
      %s280 = sshll.u32 [#allocation9], 4
      %s281 = int_to_ptr.vmem [resolvable:$true] %s280
      %283 = dma.vmem_to_hbm [thread:$0]  %s281, 256, %s3, [#allocation6]
    $region25: #{tpu_custom_call.1} parent=1 // pred_fallthru
      _
    // Predicated region
    $region26: #{tpu_custom_call.1} parent=1 // pred_check
      _
    $region27: #{tpu_custom_call.1} parent=1 // pred_check_branch
      %285 = sbr.rel (0) target = $region29
    $region28: #{tpu_custom_call.1} parent=1 // pred_region
      %286 = dma.done [#allocation6], 256
    $region29: #{tpu_custom_call.1} parent=1 // pred_fallthru
      _
    %287 = vsyncpa [#allocation5], 1
    %288 = vsyncpa [#allocation6], 1
    %289 = vsyncpa [#allocation7], 1

</llo_original>
